<compile_context>
chip_gen: v7x
topology: tpu7x:2x2x1
jax: 0.10.0
libtpu: 0.0.40
codegen_flags: <defaults>
</compile_context>

<pallas_src>
import jax
import jax.numpy as jnp
from jax.experimental import pallas as pl
from jax.experimental.pallas import tpu as pltpu


# ---------------------------------------------------------------------------
# Fused Pallas kernel: conv1..conv3 + mean-pool + lin1 + (lin2 | identity) head
# ---------------------------------------------------------------------------
def fused_gcn_kernel(a_ref, p_ref, x_ref,
                     w1_ref, b1_ref, w2_ref, b2_ref, w3_ref, b3_ref,
                     wl1_ref, bl1_ref, wh_ref, bh_ref,
                     out_ref):
    a = a_ref[...]  # (N, N) bf16 -- resident in VMEM across all three layers

    def gcn_conv(h_bf16, w_ref, b_ref):
        # (A_hat @ H) @ W + b, then ReLU.
        # bf16 MXU operands, f32 accumulation, f32 VPU tail.
        ah = jnp.dot(a, h_bf16, preferred_element_type=jnp.float32)
        hw = jnp.dot(ah.astype(jnp.bfloat16), w_ref[...],
                     preferred_element_type=jnp.float32)
        return jnp.maximum(hw + b_ref[...], 0.0)  # f32

    h = gcn_conv(x_ref[...], w1_ref, b1_ref)
    h = gcn_conv(h.astype(jnp.bfloat16), w2_ref, b2_ref)
    h = gcn_conv(h.astype(jnp.bfloat16), w3_ref, b3_ref)

    # Global mean pool: pooled = P @ H   (P is the (G, N) mean matrix)
    pooled = jnp.dot(p_ref[...], h.astype(jnp.bfloat16),
                     preferred_element_type=jnp.float32)

    # lin1 + ReLU -> embeddings
    emb = jnp.maximum(
        jnp.dot(pooled.astype(jnp.bfloat16), wl1_ref[...],
                preferred_element_type=jnp.float32) + bl1_ref[...],
        0.0,
    )

    # TODO(synk): dropout (p=0.5) after lin1 omitted -- inference mode (identity).

    # Lane-dense (G, 128) output slab in ONE matmul:
    #   wh = [ W_lin2 | I_hid | 0 ],  bh = [ b_lin2 | 0 | 0 ]
    # -> slab[:, :n_out]          = logits = emb @ W_lin2 + b_lin2
    #    slab[:, n_out:n_out+hid] = emb     (identity pass-through)
    out_ref[...] = (
        jnp.dot(emb.astype(jnp.bfloat16), wh_ref[...],
                preferred_element_type=jnp.float32) + bh_ref[...]
    )


# ---------------------------------------------------------------------------
# Plain-JAX glue: normalized adjacency and mean-pool matrix
# ---------------------------------------------------------------------------
def build_norm_adj(edge_index, num_nodes, edge_weight=None):
    src, dst = edge_index[0], edge_index[1]
    if edge_weight is None:
        edge_weight = jnp.ones(src.shape[0], dtype=jnp.float32)
    a = jnp.zeros((num_nodes, num_nodes), jnp.float32)
    a = a.at[dst, src].add(edge_weight)                  # messages flow src -> dst
    a = a + jnp.eye(num_nodes, dtype=jnp.float32)        # self loops (weight 1)
    deg = a.sum(axis=1)
    d_inv_sqrt = jnp.where(deg > 0, 1.0 / jnp.sqrt(deg), 0.0)
    return d_inv_sqrt[:, None] * a * d_inv_sqrt[None, :]


def build_mean_pool(batch, num_graphs):
    onehot = (batch[None, :] == jnp.arange(num_graphs)[:, None]).astype(jnp.float32)
    counts = jnp.maximum(onehot.sum(axis=1, keepdims=True), 1.0)
    return onehot / counts


# ---------------------------------------------------------------------------
# Full forward pass (single fused pallas_call)
# ---------------------------------------------------------------------------
LANE = 128


def basic_gcn_forward(params, x, edge_index, batch, num_graphs, edge_weight=None):
    n = x.shape[0]
    hid = params["w_lin1"].shape[1]
    n_out = params["w_lin2"].shape[1]
    slab_w = max(LANE, pl.cdiv(n_out + hid, LANE) * LANE)  # lane-dense output width

    # Glue (one-time, plain JAX) + bf16 cast of matmul operands.
    a_hat = build_norm_adj(edge_index, n, edge_weight).astype(jnp.bfloat16)
    pool_mat = build_mean_pool(batch, num_graphs).astype(jnp.bfloat16)
    x_b = x.astype(jnp.bfloat16)

    # Combined head weight: [ W_lin2 | I | 0 ]  and bias [ b_lin2 | 0 | 0 ].
    w_head = jnp.zeros((hid, slab_w), jnp.float32)
    w_head = w_head.at[:, :n_out].set(params["w_lin2"])
    w_head = w_head.at[:, n_out:n_out + hid].set(jnp.eye(hid, dtype=jnp.float32))
    b_head = jnp.zeros((1, slab_w), jnp.float32)
    b_head = b_head.at[:, :n_out].set(params["b_lin2"])

    operands = (
        a_hat, pool_mat, x_b,
        params["w_conv1"].astype(jnp.bfloat16), params["b_conv1"],
        params["w_conv2"].astype(jnp.bfloat16), params["b_conv2"],
        params["w_conv3"].astype(jnp.bfloat16), params["b_conv3"],
        params["w_lin1"].astype(jnp.bfloat16), params["b_lin1"],
        w_head.astype(jnp.bfloat16), b_head,
    )

    # VMEM budget: all residents + output, 4x headroom, clamped to [4, 64] MiB.
    resident_bytes = sum(int(o.size) * o.dtype.itemsize for o in operands)
    resident_bytes += num_graphs * slab_w * 4
    vmem_limit = int(min(64 << 20, max(4 << 20, 4 * resident_bytes)))

    slab = pl.pallas_call(
        fused_gcn_kernel,
        out_shape=jax.ShapeDtypeStruct((num_graphs, slab_w), jnp.float32),
        in_specs=[pl.BlockSpec(memory_space=pltpu.MemorySpace.VMEM)] * len(operands),
        out_specs=pl.BlockSpec(memory_space=pltpu.MemorySpace.VMEM),
        compiler_params=pltpu.CompilerParams(vmem_limit_bytes=vmem_limit),
    )(*operands)

    out = slab[:, :n_out]
    embeddings = slab[:, n_out:n_out + hid]
    return out, embeddings


# ---------------------------------------------------------------------------
# Pure-JAX reference (f32) for a sanity check
# ---------------------------------------------------------------------------
def reference_forward(params, x, edge_index, batch, num_graphs, edge_weight=None):
    a_hat = build_norm_adj(edge_index, x.shape[0], edge_weight)
    pool = build_mean_pool(batch, num_graphs)
    h = x
    for i in (1, 2, 3):
        h = jnp.maximum(a_hat @ h @ params[f"w_conv{i}"] + params[f"b_conv{i}"], 0.0)
    pooled = pool @ h
    emb = jnp.maximum(pooled @ params["w_lin1"] + params["b_lin1"], 0.0)
    out = emb @ params["w_lin2"] + params["b_lin2"]
    return out, emb


# ---------------------------------------------------------------------------
if __name__ == "__main__":
    NUM_NODE_FEATURES = 8
    NUM_HIDDEN = 32
    NUM_OUTPUTS = 4
    NODES_PER_GRAPH = 8
    NUM_GRAPHS = 16                       # 16 graphs x 8 nodes = 128 node rows
    N = NODES_PER_GRAPH * NUM_GRAPHS      # fills an MXU tile in the row dim

    key = jax.random.PRNGKey(0)
    keys = jax.random.split(key, 12)

    # Node features.
    x = jax.random.normal(keys[0], (N, NUM_NODE_FEATURES), dtype=jnp.float32)

    # Ring graphs of 8 nodes each (undirected: both edge directions).
    src_list, dst_list = [], []
    for g in range(NUM_GRAPHS):
        base = g * NODES_PER_GRAPH
        for i in range(NODES_PER_GRAPH):
            a_node = base + i
            b_node = base + (i + 1) % NODES_PER_GRAPH
            src_list += [a_node, b_node]
            dst_list += [b_node, a_node]
    edge_index = jnp.array([src_list, dst_list], dtype=jnp.int32)

    # Batch assignment: 8 consecutive nodes per graph.
    batch = jnp.repeat(jnp.arange(NUM_GRAPHS, dtype=jnp.int32), NODES_PER_GRAPH)

    def init_w(k, fan_in, fan_out):
        scale = 1.0 / jnp.sqrt(jnp.float32(fan_in))
        return jax.random.uniform(k, (fan_in, fan_out), jnp.float32, -scale, scale)

    params = {
        "w_conv1": init_w(keys[1], NUM_NODE_FEATURES, NUM_HIDDEN),
        "b_conv1": jnp.zeros((1, NUM_HIDDEN), jnp.float32),
        "w_conv2": init_w(keys[2], NUM_HIDDEN, NUM_HIDDEN),
        "b_conv2": jnp.zeros((1, NUM_HIDDEN), jnp.float32),
        "w_conv3": init_w(keys[3], NUM_HIDDEN, NUM_HIDDEN),
        "b_conv3": jnp.zeros((1, NUM_HIDDEN), jnp.float32),
        "w_lin1": init_w(keys[4], NUM_HIDDEN, NUM_HIDDEN),
        "b_lin1": 0.01 * jax.random.normal(keys[5], (1, NUM_HIDDEN), jnp.float32),
        "w_lin2": init_w(keys[6], NUM_HIDDEN, NUM_OUTPUTS),
        "b_lin2": 0.01 * jax.random.normal(keys[7], (1, NUM_OUTPUTS), jnp.float32),
    }

    out, embeddings = basic_gcn_forward(params, x, edge_index, batch, NUM_GRAPHS)
    jax.block_until_ready((out, embeddings))

    # Shape / sanity checks against a pure-JAX f32 reference (loose tol: bf16 operands).
    ref_out, ref_emb = reference_forward(params, x, edge_index, batch, NUM_GRAPHS)
    assert out.shape == (NUM_GRAPHS, NUM_OUTPUTS)
    assert embeddings.shape == (NUM_GRAPHS, NUM_HIDDEN)
    assert jnp.all(jnp.isfinite(out)) and jnp.all(jnp.isfinite(embeddings))
    assert float(jnp.max(jnp.abs(out - ref_out))) < 0.1
    assert float(jnp.max(jnp.abs(embeddings - ref_emb))) < 0.1
    print("KERNEL_OK")
</pallas_src>

<mosaic_0001>
module attributes {stable_mosaic.version = 11 : i64} {
  func.func @fused_gcn_kernel(%arg0: memref<128x128xbf16, #tpu.memory_space<vmem>>, %arg1: memref<16x128xbf16, #tpu.memory_space<vmem>>, %arg2: memref<128x8xbf16, #tpu.memory_space<vmem>>, %arg3: memref<8x32xbf16, #tpu.memory_space<vmem>>, %arg4: memref<1x32xf32, #tpu.memory_space<vmem>>, %arg5: memref<32x32xbf16, #tpu.memory_space<vmem>>, %arg6: memref<1x32xf32, #tpu.memory_space<vmem>>, %arg7: memref<32x32xbf16, #tpu.memory_space<vmem>>, %arg8: memref<1x32xf32, #tpu.memory_space<vmem>>, %arg9: memref<32x32xbf16, #tpu.memory_space<vmem>>, %arg10: memref<1x32xf32, #tpu.memory_space<vmem>>, %arg11: memref<32x128xbf16, #tpu.memory_space<vmem>>, %arg12: memref<1x128xf32, #tpu.memory_space<vmem>>, %arg13: memref<16x128xf32, #tpu.memory_space<vmem>>) attributes {dimension_semantics = [], scalar_prefetch = 0 : i64, scratch_operands = 0 : i64, tpu.core_type = #tpu.core_type<tc>} {
    %c0 = arith.constant 0 : index
    %c0_0 = arith.constant 0 : index
    %0 = vector.load %arg0[%c0, %c0_0] : memref<128x128xbf16, #tpu.memory_space<vmem>>, vector<128x128xbf16>
    %c0_1 = arith.constant 0 : index
    %c0_2 = arith.constant 0 : index
    %1 = vector.load %arg2[%c0_1, %c0_2] : memref<128x8xbf16, #tpu.memory_space<vmem>>, vector<128x8xbf16>
    %cst = arith.constant dense<0.000000e+00> : vector<128x8xf32>
    %2 = tpu.matmul %0, %1, %cst {dimension_numbers = #tpu.dot_dimension_numbers<[1], [0], [0], [1], [0, 0, 1, 1], [], []>} : vector<128x128xbf16>, vector<128x8xbf16>, vector<128x8xf32> -> vector<128x8xf32>
    %3 = arith.truncf %2 : vector<128x8xf32> to vector<128x8xbf16>
    %c0_3 = arith.constant 0 : index
    %c0_4 = arith.constant 0 : index
    %4 = vector.load %arg3[%c0_3, %c0_4] : memref<8x32xbf16, #tpu.memory_space<vmem>>, vector<8x32xbf16>
    %cst_5 = arith.constant dense<0.000000e+00> : vector<128x32xf32>
    %5 = tpu.matmul %3, %4, %cst_5 {dimension_numbers = #tpu.dot_dimension_numbers<[1], [0], [0], [1], [0, 0, 1, 1], [], []>} : vector<128x8xbf16>, vector<8x32xbf16>, vector<128x32xf32> -> vector<128x32xf32>
    %c0_6 = arith.constant 0 : index
    %c0_7 = arith.constant 0 : index
    %6 = vector.load %arg4[%c0_6, %c0_7] : memref<1x32xf32, #tpu.memory_space<vmem>>, vector<1x32xf32>
    %7 = vector.broadcast %6 : vector<1x32xf32> to vector<128x32xf32>
    %8 = arith.addf %5, %7 : vector<128x32xf32>
    %cst_8 = arith.constant 0.000000e+00 : f32
    %9 = vector.broadcast %cst_8 : f32 to vector<128x32xf32>
    %10 = arith.maximumf %8, %9 : vector<128x32xf32>
    %11 = arith.truncf %10 : vector<128x32xf32> to vector<128x32xbf16>
    %cst_9 = arith.constant dense<0.000000e+00> : vector<128x32xf32>
    %12 = tpu.matmul %0, %11, %cst_9 {dimension_numbers = #tpu.dot_dimension_numbers<[1], [0], [0], [1], [0, 0, 1, 1], [], []>} : vector<128x128xbf16>, vector<128x32xbf16>, vector<128x32xf32> -> vector<128x32xf32>
    %13 = arith.truncf %12 : vector<128x32xf32> to vector<128x32xbf16>
    %c0_10 = arith.constant 0 : index
    %c0_11 = arith.constant 0 : index
    %14 = vector.load %arg5[%c0_10, %c0_11] : memref<32x32xbf16, #tpu.memory_space<vmem>>, vector<32x32xbf16>
    %cst_12 = arith.constant dense<0.000000e+00> : vector<128x32xf32>
    %15 = tpu.matmul %13, %14, %cst_12 {dimension_numbers = #tpu.dot_dimension_numbers<[1], [0], [0], [1], [0, 0, 1, 1], [], []>} : vector<128x32xbf16>, vector<32x32xbf16>, vector<128x32xf32> -> vector<128x32xf32>
    %c0_13 = arith.constant 0 : index
    %c0_14 = arith.constant 0 : index
    %16 = vector.load %arg6[%c0_13, %c0_14] : memref<1x32xf32, #tpu.memory_space<vmem>>, vector<1x32xf32>
    %17 = vector.broadcast %16 : vector<1x32xf32> to vector<128x32xf32>
    %18 = arith.addf %15, %17 : vector<128x32xf32>
    %cst_15 = arith.constant 0.000000e+00 : f32
    %19 = vector.broadcast %cst_15 : f32 to vector<128x32xf32>
    %20 = arith.maximumf %18, %19 : vector<128x32xf32>
    %21 = arith.truncf %20 : vector<128x32xf32> to vector<128x32xbf16>
    %cst_16 = arith.constant dense<0.000000e+00> : vector<128x32xf32>
    %22 = tpu.matmul %0, %21, %cst_16 {dimension_numbers = #tpu.dot_dimension_numbers<[1], [0], [0], [1], [0, 0, 1, 1], [], []>} : vector<128x128xbf16>, vector<128x32xbf16>, vector<128x32xf32> -> vector<128x32xf32>
    %23 = arith.truncf %22 : vector<128x32xf32> to vector<128x32xbf16>
    %c0_17 = arith.constant 0 : index
    %c0_18 = arith.constant 0 : index
    %24 = vector.load %arg7[%c0_17, %c0_18] : memref<32x32xbf16, #tpu.memory_space<vmem>>, vector<32x32xbf16>
    %cst_19 = arith.constant dense<0.000000e+00> : vector<128x32xf32>
    %25 = tpu.matmul %23, %24, %cst_19 {dimension_numbers = #tpu.dot_dimension_numbers<[1], [0], [0], [1], [0, 0, 1, 1], [], []>} : vector<128x32xbf16>, vector<32x32xbf16>, vector<128x32xf32> -> vector<128x32xf32>
    %c0_20 = arith.constant 0 : index
    %c0_21 = arith.constant 0 : index
    %26 = vector.load %arg8[%c0_20, %c0_21] : memref<1x32xf32, #tpu.memory_space<vmem>>, vector<1x32xf32>
    %27 = vector.broadcast %26 : vector<1x32xf32> to vector<128x32xf32>
    %28 = arith.addf %25, %27 : vector<128x32xf32>
    %cst_22 = arith.constant 0.000000e+00 : f32
    %29 = vector.broadcast %cst_22 : f32 to vector<128x32xf32>
    %30 = arith.maximumf %28, %29 : vector<128x32xf32>
    %c0_23 = arith.constant 0 : index
    %c0_24 = arith.constant 0 : index
    %31 = vector.load %arg1[%c0_23, %c0_24] : memref<16x128xbf16, #tpu.memory_space<vmem>>, vector<16x128xbf16>
    %32 = arith.truncf %30 : vector<128x32xf32> to vector<128x32xbf16>
    %cst_25 = arith.constant dense<0.000000e+00> : vector<16x32xf32>
    %33 = tpu.matmul %31, %32, %cst_25 {dimension_numbers = #tpu.dot_dimension_numbers<[1], [0], [0], [1], [0, 0, 1, 1], [], []>} : vector<16x128xbf16>, vector<128x32xbf16>, vector<16x32xf32> -> vector<16x32xf32>
    %34 = arith.truncf %33 : vector<16x32xf32> to vector<16x32xbf16>
    %c0_26 = arith.constant 0 : index
    %c0_27 = arith.constant 0 : index
    %35 = vector.load %arg9[%c0_26, %c0_27] : memref<32x32xbf16, #tpu.memory_space<vmem>>, vector<32x32xbf16>
    %cst_28 = arith.constant dense<0.000000e+00> : vector<16x32xf32>
    %36 = tpu.matmul %34, %35, %cst_28 {dimension_numbers = #tpu.dot_dimension_numbers<[1], [0], [0], [1], [0, 0, 1, 1], [], []>} : vector<16x32xbf16>, vector<32x32xbf16>, vector<16x32xf32> -> vector<16x32xf32>
    %c0_29 = arith.constant 0 : index
    %c0_30 = arith.constant 0 : index
    %37 = vector.load %arg10[%c0_29, %c0_30] : memref<1x32xf32, #tpu.memory_space<vmem>>, vector<1x32xf32>
    %38 = vector.broadcast %37 : vector<1x32xf32> to vector<16x32xf32>
    %39 = arith.addf %36, %38 : vector<16x32xf32>
    %cst_31 = arith.constant 0.000000e+00 : f32
    %40 = vector.broadcast %cst_31 : f32 to vector<16x32xf32>
    %41 = arith.maximumf %39, %40 : vector<16x32xf32>
    %42 = arith.truncf %41 : vector<16x32xf32> to vector<16x32xbf16>
    %c0_32 = arith.constant 0 : index
    %c0_33 = arith.constant 0 : index
    %43 = vector.load %arg11[%c0_32, %c0_33] : memref<32x128xbf16, #tpu.memory_space<vmem>>, vector<32x128xbf16>
    %cst_34 = arith.constant dense<0.000000e+00> : vector<16x128xf32>
    %44 = tpu.matmul %42, %43, %cst_34 {dimension_numbers = #tpu.dot_dimension_numbers<[1], [0], [0], [1], [0, 0, 1, 1], [], []>} : vector<16x32xbf16>, vector<32x128xbf16>, vector<16x128xf32> -> vector<16x128xf32>
    %c0_35 = arith.constant 0 : index
    %c0_36 = arith.constant 0 : index
    %45 = vector.load %arg12[%c0_35, %c0_36] : memref<1x128xf32, #tpu.memory_space<vmem>>, vector<1x128xf32>
    %46 = vector.broadcast %45 : vector<1x128xf32> to vector<16x128xf32>
    %47 = arith.addf %44, %46 : vector<16x128xf32>
    %c0_37 = arith.constant 0 : index
    %c0_38 = arith.constant 0 : index
    %48 = vector.load %arg13[%c0_37, %c0_38] : memref<16x128xf32, #tpu.memory_space<vmem>>, vector<16x128xf32>
    tpu.vector_store %arg13[%c0_37, %c0_38], %47 {strides = array<i32>} : memref<16x128xf32, #tpu.memory_space<vmem>>, vector<16x128xf32>,
    return
  }
}

</mosaic_0001>

<llo_original>
// kernel: tpu_custom_call.1
$region0: #{tpu_custom_call.1}
  #allocation0 [shape = 'u32[]', space=smem, size = 0x4, offset = 0x4, fixed_abs, tag = 'smem constant byte address 0x4 - core index']
  #allocation1 [shape = 'u32[144,128]{1,0:T(1,128)}', space=vmem, size = 0x12000, scoped, tag = 'internal scratch']
  %s0 = inlined_call_operand.vmem [shape: bf16[128,128], index: 0, kind: input, shape index: {}]
  %s1 = inlined_call_operand.hbm [shape: bf16[16,128], index: 1, kind: input, shape index: {}]
  %s2 = inlined_call_operand.vmem [shape: bf16[128,8], index: 2, kind: input, shape index: {}]
  %s3 = inlined_call_operand.hbm [shape: bf16[8,32], index: 3, kind: input, shape index: {}]
  %s4 = inlined_call_operand.vmem [shape: f32[1,32], index: 4, kind: input, shape index: {}]
  %s5 = inlined_call_operand.vmem [shape: bf16[32,32], index: 5, kind: input, shape index: {}]
  %s6 = inlined_call_operand.vmem [shape: f32[1,32], index: 6, kind: input, shape index: {}]
  %s7 = inlined_call_operand.hbm [shape: bf16[32,32], index: 7, kind: input, shape index: {}]
  %s8 = inlined_call_operand.hbm [shape: f32[1,32], index: 8, kind: input, shape index: {}]
  %s9 = inlined_call_operand.vmem [shape: bf16[32,32], index: 9, kind: input, shape index: {}]
  %s10 = inlined_call_operand.vmem [shape: f32[1,32], index: 10, kind: input, shape index: {}]
  %s11 = inlined_call_operand.hbm [shape: bf16[32,128], index: 11, kind: input, shape index: {}]
  %s12 = inlined_call_operand.vmem [shape: f32[1,128], index: 12, kind: input, shape index: {}]
  %s13 = inlined_call_operand.hbm [shape: f32[16,128], index: 13, kind: output, shape index: {}]
  %s14 = sld [smem:[#allocation0]]
  $region82: #{tpu_custom_call.1} parent=0
    _
  %s16 = ssub.s32 1, %s14
  %s17 = scalar_select 0, %s16, %s14
  $region1: #{tpu_custom_call.1} parent=0
    #allocation2 [shape = 'u8[4096]{0}', space=vmem, size = 0x1000, scoped, tag = 'input window, operand 1, single buffered']
    #allocation3 [shape = 's32[1]{0}', space=sflag, size = 0x4, scoped, tag = 'scoped memory for tpu_custom_call.1']
    #allocation4 [shape = 's32[1]{0}', space=sflag, size = 0x4, scoped, tag = 'scoped memory for tpu_custom_call.1']
    #allocation5 [shape = 'u8[2048]{0}', space=vmem, size = 0x800, scoped, tag = 'input window, operand 3, single buffered']
    #allocation6 [shape = 's32[1]{0}', space=sflag, size = 0x4, scoped, tag = 'scoped memory for tpu_custom_call.1']
    #allocation7 [shape = 'u8[8192]{0}', space=vmem, size = 0x2000, scoped, tag = 'input window, operand 7, single buffered']
    #allocation8 [shape = 'u8[512]{0}', space=vmem, size = 0x400, scoped, tag = 'input window, operand 8, single buffered']
    #allocation9 [shape = 's32[1]{0}', space=sflag, size = 0x4, scoped, tag = 'scoped memory for tpu_custom_call.1']
    #allocation10 [shape = 'u8[8192]{0}', space=vmem, size = 0x2000, scoped, tag = 'input window, operand 11, single buffered']
    #allocation11 [shape = 'u8[8192]{0}', space=vmem, size = 0x2000, scoped, tag = 'output window, operand 0, single buffered']
    %18 = vsyncpa [#allocation3], 0
    %19 = vsyncpa [#allocation6], 0
    %20 = vsyncpa [#allocation9], 0
    %21 = vsyncpa [#allocation4], 0
    // Predicated region
    $region2: #{tpu_custom_call.1} parent=1 // pred_check
      _
    $region3: #{tpu_custom_call.1} parent=1 // pred_check_branch
      %23 = sbr.rel (0) target = $region5
    $region4: #{tpu_custom_call.1} parent=1 // pred_region
      _
    $region5: #{tpu_custom_call.1} parent=1 // pred_fallthru
      _
    // Predicated region
    $region6: #{tpu_custom_call.1} parent=1 // pred_check
      _
    $region7: #{tpu_custom_call.1} parent=1 // pred_check_branch
      %25 = sbr.rel (0) target = $region9
    $region8: #{tpu_custom_call.1} parent=1 // pred_region
      %s27 = ssub.s32 128, 128
      %28 = vsyncadd [#allocation3], %s27
      %s29 = sshll.u32 [#allocation2], 4
      %s30 = int_to_ptr.vmem [resolvable:$true] %s29
      %35 = dma.hbm_to_vmem [thread:$0]  %s1, 128, %s30, [#allocation3], 64, 64, 4
    $region9: #{tpu_custom_call.1} parent=1 // pred_fallthru
      _
    // Predicated region
    $region10: #{tpu_custom_call.1} parent=1 // pred_check
      _
    $region11: #{tpu_custom_call.1} parent=1 // pred_check_branch
      %37 = sbr.rel (0) target = $region13
    $region12: #{tpu_custom_call.1} parent=1 // pred_region
      _
    $region13: #{tpu_custom_call.1} parent=1 // pred_fallthru
      _
    // Predicated region
    $region14: #{tpu_custom_call.1} parent=1 // pred_check
      _
    $region15: #{tpu_custom_call.1} parent=1 // pred_check_branch
      %39 = sbr.rel (0) target = $region17
    $region16: #{tpu_custom_call.1} parent=1 // pred_region
      %s41 = ssub.s32 64, 64
      %42 = vsyncadd [#allocation6], %s41
      %s44 = sshll.u32 [#allocation5], 4
      %s45 = int_to_ptr.vmem [resolvable:$true] %s44
      %47 = dma.hbm_to_vmem [thread:$0]  %s3, 64, %s45, [#allocation6]
    $region17: #{tpu_custom_call.1} parent=1 // pred_fallthru
      _
    // Predicated region
    $region18: #{tpu_custom_call.1} parent=1 // pred_check
      _
    $region19: #{tpu_custom_call.1} parent=1 // pred_check_branch
      %49 = sbr.rel (0) target = $region21
    $region20: #{tpu_custom_call.1} parent=1 // pred_region
      _
    $region21: #{tpu_custom_call.1} parent=1 // pred_fallthru
      _
    // Predicated region
    $region22: #{tpu_custom_call.1} parent=1 // pred_check
      _
    $region23: #{tpu_custom_call.1} parent=1 // pred_check_branch
      %51 = sbr.rel (0) target = $region25
    $region24: #{tpu_custom_call.1} parent=1 // pred_region
      _
    $region25: #{tpu_custom_call.1} parent=1 // pred_fallthru
      _
    // Predicated region
    $region26: #{tpu_custom_call.1} parent=1 // pred_check
      _
    $region27: #{tpu_custom_call.1} parent=1 // pred_check_branch
      %53 = sbr.rel (0) target = $region29
    $region28: #{tpu_custom_call.1} parent=1 // pred_region
      _
    $region29: #{tpu_custom_call.1} parent=1 // pred_fallthru
      _
    // Predicated region
    $region30: #{tpu_custom_call.1} parent=1 // pred_check
      _
    $region31: #{tpu_custom_call.1} parent=1 // pred_check_branch
      %55 = sbr.rel (0) target = $region33
    $region32: #{tpu_custom_call.1} parent=1 // pred_region
      %s57 = ssub.s32 256, 256
      %58 = vsyncadd [#allocation6], %s57
      %s59 = sshll.u32 [#allocation7], 4
      %s60 = int_to_ptr.vmem [resolvable:$true] %s59
      %65 = dma.hbm_to_vmem [thread:$0]  %s7, 256, %s60, [#allocation6], 64, 64, 4
    $region33: #{tpu_custom_call.1} parent=1 // pred_fallthru
      _
    // Predicated region
    $region34: #{tpu_custom_call.1} parent=1 // pred_check
      _
    $region35: #{tpu_custom_call.1} parent=1 // pred_check_branch
      %67 = sbr.rel (0) target = $region37
    $region36: #{tpu_custom_call.1} parent=1 // pred_region
      %s69 = ssub.s32 16, 16
      %70 = vsyncadd [#allocation9], %s69
      %s72 = sshll.u32 [#allocation8], 4
      %s73 = int_to_ptr.vmem [resolvable:$true] %s72
      %75 = dma.hbm_to_vmem [thread:$0]  %s8, 16, %s73, [#allocation9]
    $region37: #{tpu_custom_call.1} parent=1 // pred_fallthru
      _
    // Predicated region
    $region38: #{tpu_custom_call.1} parent=1 // pred_check
      _
    $region39: #{tpu_custom_call.1} parent=1 // pred_check_branch
      %77 = sbr.rel (0) target = $region41
    $region40: #{tpu_custom_call.1} parent=1 // pred_region
      _
    $region41: #{tpu_custom_call.1} parent=1 // pred_fallthru
      _
    // Predicated region
    $region42: #{tpu_custom_call.1} parent=1 // pred_check
      _
    $region43: #{tpu_custom_call.1} parent=1 // pred_check_branch
      %79 = sbr.rel (0) target = $region45
    $region44: #{tpu_custom_call.1} parent=1 // pred_region
      _
    $region45: #{tpu_custom_call.1} parent=1 // pred_fallthru
      _
    // Predicated region
    $region46: #{tpu_custom_call.1} parent=1 // pred_check
      _
    $region47: #{tpu_custom_call.1} parent=1 // pred_check_branch
      %81 = sbr.rel (0) target = $region49
    $region48: #{tpu_custom_call.1} parent=1 // pred_region
      %s83 = ssub.s32 256, 256
      %84 = vsyncadd [#allocation9], %s83
      %s85 = sshll.u32 [#allocation10], 4
      %s86 = int_to_ptr.vmem [resolvable:$true] %s85
      %91 = dma.hbm_to_vmem [thread:$0]  %s11, 256, %s86, [#allocation9], 64, 64, 4
    $region49: #{tpu_custom_call.1} parent=1 // pred_fallthru
      _
    // Predicated region
    $region50: #{tpu_custom_call.1} parent=1 // pred_check
      _
    $region51: #{tpu_custom_call.1} parent=1 // pred_check_branch
      %93 = sbr.rel (0) target = $region53
    $region52: #{tpu_custom_call.1} parent=1 // pred_region
      _
    $region53: #{tpu_custom_call.1} parent=1 // pred_fallthru
      _
    // Predicated region
    $region54: #{tpu_custom_call.1} parent=1 // pred_check
      _
    $region55: #{tpu_custom_call.1} parent=1 // pred_check_branch
      %95 = sbr.rel (0) target = $region57
    $region56: #{tpu_custom_call.1} parent=1 // pred_region
      %96 = dma.done [#allocation3], 128
    $region57: #{tpu_custom_call.1} parent=1 // pred_fallthru
      _
    // Predicated region
    $region58: #{tpu_custom_call.1} parent=1 // pred_check
      _
    $region59: #{tpu_custom_call.1} parent=1 // pred_check_branch
      %98 = sbr.rel (0) target = $region61
    $region60: #{tpu_custom_call.1} parent=1 // pred_region
      %99 = dma.done [#allocation6], 64
    $region61: #{tpu_custom_call.1} parent=1 // pred_fallthru
      _
    // Predicated region
    $region62: #{tpu_custom_call.1} parent=1 // pred_check
      _
    $region63: #{tpu_custom_call.1} parent=1 // pred_check_branch
      %101 = sbr.rel (0) target = $region65
    $region64: #{tpu_custom_call.1} parent=1 // pred_region
      %102 = dma.done [#allocation6], 256
    $region65: #{tpu_custom_call.1} parent=1 // pred_fallthru
      _
    // Predicated region
    $region66: #{tpu_custom_call.1} parent=1 // pred_check
      _
    $region67: #{tpu_custom_call.1} parent=1 // pred_check_branch
      %104 = sbr.rel (0) target = $region69
    $region68: #{tpu_custom_call.1} parent=1 // pred_region
      %105 = dma.done [#allocation9], 16
    $region69: #{tpu_custom_call.1} parent=1 // pred_fallthru
      _
    // Predicated region
    $region70: #{tpu_custom_call.1} parent=1 // pred_check
      _
    $region71: #{tpu_custom_call.1} parent=1 // pred_check_branch
      %107 = sbr.rel (0) target = $region73
    $region72: #{tpu_custom_call.1} parent=1 // pred_region
      %108 = dma.done [#allocation9], 256
    $region73: #{tpu_custom_call.1} parent=1 // pred_fallthru
      _
    %v110 = vld [vmem:[%s0] sm:$0xf]
    %v111 = vld [vmem:[%s0 + $0x4] sm:$0xf]
    %v112 = vld [vmem:[%s0 + $0x8] sm:$0xf]
    %v113 = vld [vmem:[%s0 + $0xc] sm:$0xf]
    %v114 = vld [vmem:[%s0 + $0x10] sm:$0xf]
    %v115 = vld [vmem:[%s0 + $0x14] sm:$0xf]
    %v116 = vld [vmem:[%s0 + $0x18] sm:$0xf]
    %v117 = vld [vmem:[%s0 + $0x1c] sm:$0xf]
    %v118 = vld [vmem:[%s0 + $0x20] sm:$0xf]
    %v119 = vld [vmem:[%s0 + $0x24] sm:$0xf]
    %v120 = vld [vmem:[%s0 + $0x28] sm:$0xf]
    %v121 = vld [vmem:[%s0 + $0x2c] sm:$0xf]
    %v122 = vld [vmem:[%s0 + $0x30] sm:$0xf]
    %v123 = vld [vmem:[%s0 + $0x34] sm:$0xf]
    %v124 = vld [vmem:[%s0 + $0x38] sm:$0xf]
    %v125 = vld [vmem:[%s0 + $0x3c] sm:$0xf]
    %v126 = vld [vmem:[%s2] sm:$0xf]
    %v127 = vld [vmem:[%s2 + $0x4] sm:$0xf]
    %v128 = vld [vmem:[%s2 + $0x8] sm:$0xf]
    %v129 = vld [vmem:[%s2 + $0xc] sm:$0xf]
    %v130 = vld [vmem:[%s2 + $0x10] sm:$0xf]
    %v131 = vld [vmem:[%s2 + $0x14] sm:$0xf]
    %v132 = vld [vmem:[%s2 + $0x18] sm:$0xf]
    %v133 = vld [vmem:[%s2 + $0x1c] sm:$0xf]
    %v134 = vld [vmem:[%s2 + $0x20] sm:$0xf]
    %v135 = vld [vmem:[%s2 + $0x24] sm:$0xf]
    %v136 = vld [vmem:[%s2 + $0x28] sm:$0xf]
    %v137 = vld [vmem:[%s2 + $0x2c] sm:$0xf]
    %v138 = vld [vmem:[%s2 + $0x30] sm:$0xf]
    %v139 = vld [vmem:[%s2 + $0x34] sm:$0xf]
    %v140 = vld [vmem:[%s2 + $0x38] sm:$0xf]
    %v141 = vld [vmem:[%s2 + $0x3c] sm:$0xf]
    %v158 = vunpack.c.l.b16 %v110
    %v159 = vunpack.c.l.b16 %v111
    %v160 = vunpack.c.l.b16 %v112
    %v161 = vunpack.c.l.b16 %v113
    %v162 = vunpack.c.l.b16 %v114
    %v163 = vunpack.c.l.b16 %v115
    %v164 = vunpack.c.l.b16 %v116
    %v165 = vunpack.c.l.b16 %v117
    %v166 = vunpack.c.l.b16 %v118
    %v167 = vunpack.c.l.b16 %v119
    %v168 = vunpack.c.l.b16 %v120
    %v169 = vunpack.c.l.b16 %v121
    %v170 = vunpack.c.l.b16 %v122
    %v171 = vunpack.c.l.b16 %v123
    %v172 = vunpack.c.l.b16 %v124
    %v173 = vunpack.c.l.b16 %v125
    %v174 = vpack.c.b16 %v159, %v158
    %v175 = vpack.c.b16 %v161, %v160
    %v176 = vpack.c.b16 %v163, %v162
    %v177 = vpack.c.b16 %v165, %v164
    %v178 = vpack.c.b16 %v167, %v166
    %v179 = vpack.c.b16 %v169, %v168
    %v180 = vpack.c.b16 %v171, %v170
    %v181 = vpack.c.b16 %v173, %v172
    %v206 = vunpack.c.l.b16 %v126
    %v207 = vunpack.c.l.b16 %v127
    %v208 = vunpack.c.l.b16 %v128
    %v209 = vunpack.c.l.b16 %v129
    %v210 = vunpack.c.l.b16 %v130
    %v211 = vunpack.c.l.b16 %v131
    %v212 = vunpack.c.l.b16 %v132
    %v213 = vunpack.c.l.b16 %v133
    %v214 = vunpack.c.l.b16 %v134
    %v215 = vunpack.c.l.b16 %v135
    %v216 = vunpack.c.l.b16 %v136
    %v217 = vunpack.c.l.b16 %v137
    %v218 = vunpack.c.l.b16 %v138
    %v219 = vunpack.c.l.b16 %v139
    %v220 = vunpack.c.l.b16 %v140
    %v221 = vunpack.c.l.b16 %v141
    %v222 = vpack.c.b16 %v207, %v206
    %v223 = vpack.c.b16 %v209, %v208
    %v224 = vpack.c.b16 %v211, %v210
    %v225 = vpack.c.b16 %v213, %v212
    %v226 = vpack.c.b16 %v215, %v214
    %v227 = vpack.c.b16 %v217, %v216
    %v228 = vpack.c.b16 %v219, %v218
    %v229 = vpack.c.b16 %v221, %v220
    %238 = vmatprep.subr.bf16.mxu0 0
    %239 = vmatpush1.bf16.msra.mxu0 %v222
    %240 = vmatprep.subr.bf16.mxu0 0
    %241 = vmatpush1.bf16.msra.mxu0 %v223
    %242 = vmatprep.subr.bf16.mxu0 0
    %243 = vmatpush1.bf16.msra.mxu0 %v224
    %244 = vmatprep.subr.bf16.mxu0 0
    %245 = vmatpush1.bf16.msra.mxu0 %v225
    %246 = vmatprep.subr.bf16.mxu0 0
    %247 = vmatpush1.bf16.msra.mxu0 %v226
    %248 = vmatprep.subr.bf16.mxu0 0
    %249 = vmatpush1.bf16.msra.mxu0 %v227
    %250 = vmatprep.subr.bf16.mxu0 0
    %251 = vmatpush1.bf16.msra.mxu0 %v228
    %252 = vmatprep.subr.bf16.mxu0 0
    %253 = vmatpush1.bf16.msra.mxu0 %v229
    %254 = vmatprep.subr.bf16.mxu0 0
    %255 = vmatpush1.bf16.msra.mxu0 0
    %256 = vmatprep.subr.bf16.mxu0 0
    %257 = vmatpush1.bf16.msra.mxu0 0
    %258 = vmatprep.subr.bf16.mxu0 0
    %259 = vmatpush1.bf16.msra.mxu0 0
    %260 = vmatprep.subr.bf16.mxu0 0
    %261 = vmatpush1.bf16.msra.mxu0 0
    %262 = vmatprep.subr.bf16.mxu0 0
    %263 = vmatpush1.bf16.msra.mxu0 0
    %264 = vmatprep.subr.bf16.mxu0 0
    %265 = vmatpush1.bf16.msra.mxu0 0
    %266 = vmatprep.subr.bf16.mxu0 0
    %267 = vmatpush1.bf16.msra.mxu0 0
    %268 = vmatprep.subr.bf16.mxu0 0
    %269 = vmatpush1.bf16.msra.mxu0 0
    %270 = vmatprep.mubr.bf16.mxu0 0
    %271 = vmatmul.mubr.bf16.gmra.mrb[0].mxu0 %v174
    %v272 = vpop.f32.mrb[0].mxu0
    %v273 = vadd.f32 0.0, %v272
    %v274 = vpop.f32.mrb[0].mxu0
    %v275 = vpop.f32.mrb[0].mxu0
    %v276 = vadd.f32 0.0, %v275
    %v277 = vpop.f32.mrb[0].mxu0
    %278 = vmatprep.mubr.bf16.mxu0 0
    %279 = vmatmul.mubr.bf16.gmra.mrb[0].mxu0 %v175
    %v280 = vpop.f32.mrb[0].mxu0
    %v281 = vadd.f32 0.0, %v280
    %v282 = vpop.f32.mrb[0].mxu0
    %v283 = vpop.f32.mrb[0].mxu0
    %v284 = vadd.f32 0.0, %v283
    %v285 = vpop.f32.mrb[0].mxu0
    %286 = vmatprep.mubr.bf16.mxu0 0
    %287 = vmatmul.mubr.bf16.gmra.mrb[0].mxu0 %v176
    %v288 = vpop.f32.mrb[0].mxu0
    %v289 = vadd.f32 0.0, %v288
    %v290 = vpop.f32.mrb[0].mxu0
    %v291 = vpop.f32.mrb[0].mxu0
    %v292 = vadd.f32 0.0, %v291
    %v293 = vpop.f32.mrb[0].mxu0
    %294 = vmatprep.mubr.bf16.mxu0 0
    %295 = vmatmul.mubr.bf16.gmra.mrb[0].mxu0 %v177
    %v296 = vpop.f32.mrb[0].mxu0
    %v297 = vadd.f32 0.0, %v296
    %v298 = vpop.f32.mrb[0].mxu0
    %v299 = vpop.f32.mrb[0].mxu0
    %v300 = vadd.f32 0.0, %v299
    %v301 = vpop.f32.mrb[0].mxu0
    %302 = vmatprep.mubr.bf16.mxu0 0
    %303 = vmatmul.mubr.bf16.gmra.mrb[0].mxu0 %v178
    %v304 = vpop.f32.mrb[0].mxu0
    %v305 = vadd.f32 0.0, %v304
    %v306 = vpop.f32.mrb[0].mxu0
    %v307 = vpop.f32.mrb[0].mxu0
    %v308 = vadd.f32 0.0, %v307
    %v309 = vpop.f32.mrb[0].mxu0
    %310 = vmatprep.mubr.bf16.mxu0 0
    %311 = vmatmul.mubr.bf16.gmra.mrb[0].mxu0 %v179
    %v312 = vpop.f32.mrb[0].mxu0
    %v313 = vadd.f32 0.0, %v312
    %v314 = vpop.f32.mrb[0].mxu0
    %v315 = vpop.f32.mrb[0].mxu0
    %v316 = vadd.f32 0.0, %v315
    %v317 = vpop.f32.mrb[0].mxu0
    %318 = vmatprep.mubr.bf16.mxu0 0
    %319 = vmatmul.mubr.bf16.gmra.mrb[0].mxu0 %v180
    %v320 = vpop.f32.mrb[0].mxu0
    %v321 = vadd.f32 0.0, %v320
    %v322 = vpop.f32.mrb[0].mxu0
    %v323 = vpop.f32.mrb[0].mxu0
    %v324 = vadd.f32 0.0, %v323
    %v325 = vpop.f32.mrb[0].mxu0
    %326 = vmatprep.mubr.bf16.mxu0 0
    %327 = vmatmul.mubr.bf16.gmra.mrb[0].mxu0 %v181
    %v328 = vpop.f32.mrb[0].mxu0
    %v329 = vadd.f32 0.0, %v328
    %v330 = vpop.f32.mrb[0].mxu0
    %v331 = vpop.f32.mrb[0].mxu0
    %v332 = vadd.f32 0.0, %v331
    %v333 = vpop.f32.mrb[0].mxu0
    %334 = vdwg.mxu0
    %v335 = vpack.c.bf16 %v276, %v273
    %v336 = vpack.c.bf16 %v284, %v281
    %v337 = vpack.c.bf16 %v292, %v289
    %v338 = vpack.c.bf16 %v300, %v297
    %v339 = vpack.c.bf16 %v308, %v305
    %v340 = vpack.c.bf16 %v316, %v313
    %v341 = vpack.c.bf16 %v324, %v321
    %v342 = vpack.c.bf16 %v332, %v329
    %v343 = vld [vmem:[#allocation5] sm:$0xf]
    %v344 = vld [vmem:[%s4] sm:$0x1]
    %v346 = vlaneseq
    %v347 = vshrl.u32 %v346, 7
    %v348 = vsub.s32 0, %v347
    %v349 = vrot.slane %v344, %v348
    %vm351 = vcmask 64512
    %v353 = vsel %vm351, %v335, 0
    %v356 = vsel %vm351, %v336, 0
    %v359 = vsel %vm351, %v337, 0
    %v362 = vsel %vm351, %v338, 0
    %v365 = vsel %vm351, %v339, 0
    %v368 = vsel %vm351, %v340, 0
    %v371 = vsel %vm351, %v341, 0
    %v374 = vsel %vm351, %v342, 0
    %vm376 = vcmask 1043456
    %v378 = vsel %vm376, %v343, 0
    %380 = vmatprep.subr.bf16.mxu0 0
    %381 = vmatpush1.bf16.msra.mxu0 %v378
    %382 = vmatprep.subr.bf16.mxu0 0
    %383 = vmatpush1.bf16.msra.mxu0 0
    %384 = vmatprep.subr.bf16.mxu0 0
    %385 = vmatpush1.bf16.msra.mxu0 0
    %386 = vmatprep.subr.bf16.mxu0 0
    %387 = vmatpush1.bf16.msra.mxu0 0
    %388 = vmatprep.subr.bf16.mxu0 0
    %389 = vmatpush1.bf16.msra.mxu0 0
    %390 = vmatprep.subr.bf16.mxu0 0
    %391 = vmatpush1.bf16.msra.mxu0 0
    %392 = vmatprep.subr.bf16.mxu0 0
    %393 = vmatpush1.bf16.msra.mxu0 0
    %394 = vmatprep.subr.bf16.mxu0 0
    %395 = vmatpush1.bf16.msra.mxu0 0
    %396 = vmatprep.subr.bf16.mxu0 0
    %397 = vmatpush1.bf16.msra.mxu0 0
    %398 = vmatprep.subr.bf16.mxu0 0
    %399 = vmatpush1.bf16.msra.mxu0 0
    %400 = vmatprep.subr.bf16.mxu0 0
    %401 = vmatpush1.bf16.msra.mxu0 0
    %402 = vmatprep.subr.bf16.mxu0 0
    %403 = vmatpush1.bf16.msra.mxu0 0
    %404 = vmatprep.subr.bf16.mxu0 0
    %405 = vmatpush1.bf16.msra.mxu0 0
    %406 = vmatprep.subr.bf16.mxu0 0
    %407 = vmatpush1.bf16.msra.mxu0 0
    %408 = vmatprep.subr.bf16.mxu0 0
    %409 = vmatpush1.bf16.msra.mxu0 0
    %410 = vmatprep.subr.bf16.mxu0 0
    %411 = vmatpush1.bf16.msra.mxu0 0
    %412 = vmatprep.mubr.bf16.mxu0 0
    %413 = vmatmul.mubr.bf16.gmra.mrb[0].mxu0 %v353
    %v414 = vpop.f32.mrb[0].mxu0
    %v415 = vadd.f32 %v349, %v414
    %v416 = vpop.f32.mrb[0].mxu0
    %v417 = vpop.f32.mrb[0].mxu0
    %v418 = vadd.f32 %v349, %v417
    %v419 = vpop.f32.mrb[0].mxu0
    %420 = vmatprep.mubr.bf16.mxu0 0
    %421 = vmatmul.mubr.bf16.gmra.mrb[0].mxu0 %v356
    %v422 = vpop.f32.mrb[0].mxu0
    %v423 = vadd.f32 %v349, %v422
    %v424 = vpop.f32.mrb[0].mxu0
    %v425 = vpop.f32.mrb[0].mxu0
    %v426 = vadd.f32 %v349, %v425
    %v427 = vpop.f32.mrb[0].mxu0
    %428 = vmatprep.mubr.bf16.mxu0 0
    %429 = vmatmul.mubr.bf16.gmra.mrb[0].mxu0 %v359
    %v430 = vpop.f32.mrb[0].mxu0
    %v431 = vadd.f32 %v349, %v430
    %v432 = vpop.f32.mrb[0].mxu0
    %v433 = vpop.f32.mrb[0].mxu0
    %v434 = vadd.f32 %v349, %v433
    %v435 = vpop.f32.mrb[0].mxu0
    %436 = vmatprep.mubr.bf16.mxu0 0
    %437 = vmatmul.mubr.bf16.gmra.mrb[0].mxu0 %v362
    %v438 = vpop.f32.mrb[0].mxu0
    %v439 = vadd.f32 %v349, %v438
    %v440 = vpop.f32.mrb[0].mxu0
    %v441 = vpop.f32.mrb[0].mxu0
    %v442 = vadd.f32 %v349, %v441
    %v443 = vpop.f32.mrb[0].mxu0
    %444 = vmatprep.mubr.bf16.mxu0 0
    %445 = vmatmul.mubr.bf16.gmra.mrb[0].mxu0 %v365
    %v446 = vpop.f32.mrb[0].mxu0
    %v447 = vadd.f32 %v349, %v446
    %v448 = vpop.f32.mrb[0].mxu0
    %v449 = vpop.f32.mrb[0].mxu0
    %v450 = vadd.f32 %v349, %v449
    %v451 = vpop.f32.mrb[0].mxu0
    %452 = vmatprep.mubr.bf16.mxu0 0
    %453 = vmatmul.mubr.bf16.gmra.mrb[0].mxu0 %v368
    %v454 = vpop.f32.mrb[0].mxu0
    %v455 = vadd.f32 %v349, %v454
    %v456 = vpop.f32.mrb[0].mxu0
    %v457 = vpop.f32.mrb[0].mxu0
    %v458 = vadd.f32 %v349, %v457
    %v459 = vpop.f32.mrb[0].mxu0
    %460 = vmatprep.mubr.bf16.mxu0 0
    %461 = vmatmul.mubr.bf16.gmra.mrb[0].mxu0 %v371
    %v462 = vpop.f32.mrb[0].mxu0
    %v463 = vadd.f32 %v349, %v462
    %v464 = vpop.f32.mrb[0].mxu0
    %v465 = vpop.f32.mrb[0].mxu0
    %v466 = vadd.f32 %v349, %v465
    %v467 = vpop.f32.mrb[0].mxu0
    %468 = vmatprep.mubr.bf16.mxu0 0
    %469 = vmatmul.mubr.bf16.gmra.mrb[0].mxu0 %v374
    %v470 = vpop.f32.mrb[0].mxu0
    %v471 = vadd.f32 %v349, %v470
    %v472 = vpop.f32.mrb[0].mxu0
    %v473 = vpop.f32.mrb[0].mxu0
    %v474 = vadd.f32 %v349, %v473
    %v475 = vpop.f32.mrb[0].mxu0
    %476 = vdwg.mxu0
    %v477 = vmax.f32 %v415, 0.0
    %v478 = vmax.f32 %v418, 0.0
    %v479 = vmax.f32 %v423, 0.0
    %v480 = vmax.f32 %v426, 0.0
    %v481 = vmax.f32 %v431, 0.0
    %v482 = vmax.f32 %v434, 0.0
    %v483 = vmax.f32 %v439, 0.0
    %v484 = vmax.f32 %v442, 0.0
    %v485 = vmax.f32 %v447, 0.0
    %v486 = vmax.f32 %v450, 0.0
    %v487 = vmax.f32 %v455, 0.0
    %v488 = vmax.f32 %v458, 0.0
    %v489 = vmax.f32 %v463, 0.0
    %v490 = vmax.f32 %v466, 0.0
    %v491 = vmax.f32 %v471, 0.0
    %v492 = vmax.f32 %v474, 0.0
    %v493 = vpack.c.bf16 %v478, %v477
    %v494 = vpack.c.bf16 %v480, %v479
    %v495 = vpack.c.bf16 %v482, %v481
    %v496 = vpack.c.bf16 %v484, %v483
    %v497 = vpack.c.bf16 %v486, %v485
    %v498 = vpack.c.bf16 %v488, %v487
    %v499 = vpack.c.bf16 %v490, %v489
    %v500 = vpack.c.bf16 %v492, %v491
    %501 = vmatprep.subr.bf16.mxu0 0
    %502 = vmatpush1.bf16.msra.mxu0 %v493
    %503 = vmatprep.subr.bf16.mxu0 0
    %504 = vmatpush1.bf16.msra.mxu0 %v494
    %505 = vmatprep.subr.bf16.mxu0 0
    %506 = vmatpush1.bf16.msra.mxu0 %v495
    %507 = vmatprep.subr.bf16.mxu0 0
    %508 = vmatpush1.bf16.msra.mxu0 %v496
    %509 = vmatprep.subr.bf16.mxu0 0
    %510 = vmatpush1.bf16.msra.mxu0 %v497
    %511 = vmatprep.subr.bf16.mxu0 0
    %512 = vmatpush1.bf16.msra.mxu0 %v498
    %513 = vmatprep.subr.bf16.mxu0 0
    %514 = vmatpush1.bf16.msra.mxu0 %v499
    %515 = vmatprep.subr.bf16.mxu0 0
    %516 = vmatpush1.bf16.msra.mxu0 %v500
    %517 = vmatprep.subr.bf16.mxu0 0
    %518 = vmatpush1.bf16.msra.mxu0 0
    %519 = vmatprep.subr.bf16.mxu0 0
    %520 = vmatpush1.bf16.msra.mxu0 0
    %521 = vmatprep.subr.bf16.mxu0 0
    %522 = vmatpush1.bf16.msra.mxu0 0
    %523 = vmatprep.subr.bf16.mxu0 0
    %524 = vmatpush1.bf16.msra.mxu0 0
    %525 = vmatprep.subr.bf16.mxu0 0
    %526 = vmatpush1.bf16.msra.mxu0 0
    %527 = vmatprep.subr.bf16.mxu0 0
    %528 = vmatpush1.bf16.msra.mxu0 0
    %529 = vmatprep.subr.bf16.mxu0 0
    %530 = vmatpush1.bf16.msra.mxu0 0
    %531 = vmatprep.subr.bf16.mxu0 0
    %532 = vmatpush1.bf16.msra.mxu0 0
    %533 = vmatprep.mubr.bf16.mxu0 0
    %534 = vmatmul.mubr.bf16.gmra.mrb[0].mxu0 %v174
    %v535 = vpop.f32.mrb[0].mxu0
    %v536 = vadd.f32 0.0, %v535
    %v537 = vpop.f32.mrb[0].mxu0
    %v538 = vpop.f32.mrb[0].mxu0
    %v539 = vadd.f32 0.0, %v538
    %v540 = vpop.f32.mrb[0].mxu0
    %541 = vmatprep.mubr.bf16.mxu0 0
    %542 = vmatmul.mubr.bf16.gmra.mrb[0].mxu0 %v175
    %v543 = vpop.f32.mrb[0].mxu0
    %v544 = vadd.f32 0.0, %v543
    %v545 = vpop.f32.mrb[0].mxu0
    %v546 = vpop.f32.mrb[0].mxu0
    %v547 = vadd.f32 0.0, %v546
    %v548 = vpop.f32.mrb[0].mxu0
    %549 = vmatprep.mubr.bf16.mxu0 0
    %550 = vmatmul.mubr.bf16.gmra.mrb[0].mxu0 %v176
    %v551 = vpop.f32.mrb[0].mxu0
    %v552 = vadd.f32 0.0, %v551
    %v553 = vpop.f32.mrb[0].mxu0
    %v554 = vpop.f32.mrb[0].mxu0
    %v555 = vadd.f32 0.0, %v554
    %v556 = vpop.f32.mrb[0].mxu0
    %557 = vmatprep.mubr.bf16.mxu0 0
    %558 = vmatmul.mubr.bf16.gmra.mrb[0].mxu0 %v177
    %v559 = vpop.f32.mrb[0].mxu0
    %v560 = vadd.f32 0.0, %v559
    %v561 = vpop.f32.mrb[0].mxu0
    %v562 = vpop.f32.mrb[0].mxu0
    %v563 = vadd.f32 0.0, %v562
    %v564 = vpop.f32.mrb[0].mxu0
    %565 = vmatprep.mubr.bf16.mxu0 0
    %566 = vmatmul.mubr.bf16.gmra.mrb[0].mxu0 %v178
    %v567 = vpop.f32.mrb[0].mxu0
    %v568 = vadd.f32 0.0, %v567
    %v569 = vpop.f32.mrb[0].mxu0
    %v570 = vpop.f32.mrb[0].mxu0
    %v571 = vadd.f32 0.0, %v570
    %v572 = vpop.f32.mrb[0].mxu0
    %573 = vmatprep.mubr.bf16.mxu0 0
    %574 = vmatmul.mubr.bf16.gmra.mrb[0].mxu0 %v179
    %v575 = vpop.f32.mrb[0].mxu0
    %v576 = vadd.f32 0.0, %v575
    %v577 = vpop.f32.mrb[0].mxu0
    %v578 = vpop.f32.mrb[0].mxu0
    %v579 = vadd.f32 0.0, %v578
    %v580 = vpop.f32.mrb[0].mxu0
    %581 = vmatprep.mubr.bf16.mxu0 0
    %582 = vmatmul.mubr.bf16.gmra.mrb[0].mxu0 %v180
    %v583 = vpop.f32.mrb[0].mxu0
    %v584 = vadd.f32 0.0, %v583
    %v585 = vpop.f32.mrb[0].mxu0
    %v586 = vpop.f32.mrb[0].mxu0
    %v587 = vadd.f32 0.0, %v586
    %v588 = vpop.f32.mrb[0].mxu0
    %589 = vmatprep.mubr.bf16.mxu0 0
    %590 = vmatmul.mubr.bf16.gmra.mrb[0].mxu0 %v181
    %v591 = vpop.f32.mrb[0].mxu0
    %v592 = vadd.f32 0.0, %v591
    %v593 = vpop.f32.mrb[0].mxu0
    %v594 = vpop.f32.mrb[0].mxu0
    %v595 = vadd.f32 0.0, %v594
    %v596 = vpop.f32.mrb[0].mxu0
    %597 = vdwg.mxu0
    %v598 = vpack.c.bf16 %v539, %v536
    %v599 = vpack.c.bf16 %v547, %v544
    %v600 = vpack.c.bf16 %v555, %v552
    %v601 = vpack.c.bf16 %v563, %v560
    %v602 = vpack.c.bf16 %v571, %v568
    %v603 = vpack.c.bf16 %v579, %v576
    %v604 = vpack.c.bf16 %v587, %v584
    %v605 = vpack.c.bf16 %v595, %v592
    %v606 = vld [vmem:[%s5] sm:$0xf]
    %v607 = vld [vmem:[%s5 + $0x4] sm:$0xf]
    %v608 = vld [vmem:[%s5 + $0x8] sm:$0xf]
    %v609 = vld [vmem:[%s5 + $0xc] sm:$0xf]
    %v610 = vld [vmem:[%s6] sm:$0x1]
    %v612 = vlaneseq
    %v613 = vshrl.u32 %v612, 7
    %v614 = vsub.s32 0, %v613
    %v615 = vrot.slane %v610, %v614
    %v621 = vunpack.c.l.b16 %v606
    %v622 = vunpack.c.l.b16 %v607
    %v623 = vunpack.c.l.b16 %v608
    %v624 = vunpack.c.l.b16 %v609
    %v625 = vpack.c.b16 %v622, %v621
    %v626 = vpack.c.b16 %v624, %v623
    %vm629 = vcmask 261120
    %v631 = vsel %vm629, %v598, 0
    %v634 = vsel %vm629, %v599, 0
    %v637 = vsel %vm629, %v600, 0
    %v640 = vsel %vm629, %v601, 0
    %v643 = vsel %vm629, %v602, 0
    %v646 = vsel %vm629, %v603, 0
    %v649 = vsel %vm629, %v604, 0
    %v652 = vsel %vm629, %v605, 0
    %654 = vmatprep.subr.bf16.mxu0 0
    %655 = vmatpush1.bf16.msra.mxu0 %v625
    %656 = vmatprep.subr.bf16.mxu0 0
    %657 = vmatpush1.bf16.msra.mxu0 %v626
    %658 = vmatprep.subr.bf16.mxu0 0
    %659 = vmatpush1.bf16.msra.mxu0 0
    %660 = vmatprep.subr.bf16.mxu0 0
    %661 = vmatpush1.bf16.msra.mxu0 0
    %662 = vmatprep.subr.bf16.mxu0 0
    %663 = vmatpush1.bf16.msra.mxu0 0
    %664 = vmatprep.subr.bf16.mxu0 0
    %665 = vmatpush1.bf16.msra.mxu0 0
    %666 = vmatprep.subr.bf16.mxu0 0
    %667 = vmatpush1.bf16.msra.mxu0 0
    %668 = vmatprep.subr.bf16.mxu0 0
    %669 = vmatpush1.bf16.msra.mxu0 0
    %670 = vmatprep.subr.bf16.mxu0 0
    %671 = vmatpush1.bf16.msra.mxu0 0
    %672 = vmatprep.subr.bf16.mxu0 0
    %673 = vmatpush1.bf16.msra.mxu0 0
    %674 = vmatprep.subr.bf16.mxu0 0
    %675 = vmatpush1.bf16.msra.mxu0 0
    %676 = vmatprep.subr.bf16.mxu0 0
    %677 = vmatpush1.bf16.msra.mxu0 0
    %678 = vmatprep.subr.bf16.mxu0 0
    %679 = vmatpush1.bf16.msra.mxu0 0
    %680 = vmatprep.subr.bf16.mxu0 0
    %681 = vmatpush1.bf16.msra.mxu0 0
    %682 = vmatprep.subr.bf16.mxu0 0
    %683 = vmatpush1.bf16.msra.mxu0 0
    %684 = vmatprep.subr.bf16.mxu0 0
    %685 = vmatpush1.bf16.msra.mxu0 0
    %686 = vmatprep.mubr.bf16.mxu0 0
    %687 = vmatmul.mubr.bf16.gmra.mrb[0].mxu0 %v631
    %v688 = vpop.f32.mrb[0].mxu0
    %v689 = vadd.f32 %v615, %v688
    %v690 = vpop.f32.mrb[0].mxu0
    %v691 = vpop.f32.mrb[0].mxu0
    %v692 = vadd.f32 %v615, %v691
    %v693 = vpop.f32.mrb[0].mxu0
    %694 = vmatprep.mubr.bf16.mxu0 0
    %695 = vmatmul.mubr.bf16.gmra.mrb[0].mxu0 %v634
    %v696 = vpop.f32.mrb[0].mxu0
    %v697 = vadd.f32 %v615, %v696
    %v698 = vpop.f32.mrb[0].mxu0
    %v699 = vpop.f32.mrb[0].mxu0
    %v700 = vadd.f32 %v615, %v699
    %v701 = vpop.f32.mrb[0].mxu0
    %702 = vmatprep.mubr.bf16.mxu0 0
    %703 = vmatmul.mubr.bf16.gmra.mrb[0].mxu0 %v637
    %v704 = vpop.f32.mrb[0].mxu0
    %v705 = vadd.f32 %v615, %v704
    %v706 = vpop.f32.mrb[0].mxu0
    %v707 = vpop.f32.mrb[0].mxu0
    %v708 = vadd.f32 %v615, %v707
    %v709 = vpop.f32.mrb[0].mxu0
    %710 = vmatprep.mubr.bf16.mxu0 0
    %711 = vmatmul.mubr.bf16.gmra.mrb[0].mxu0 %v640
    %v712 = vpop.f32.mrb[0].mxu0
    %v713 = vadd.f32 %v615, %v712
    %v714 = vpop.f32.mrb[0].mxu0
    %v715 = vpop.f32.mrb[0].mxu0
    %v716 = vadd.f32 %v615, %v715
    %v717 = vpop.f32.mrb[0].mxu0
    %718 = vmatprep.mubr.bf16.mxu0 0
    %719 = vmatmul.mubr.bf16.gmra.mrb[0].mxu0 %v643
    %v720 = vpop.f32.mrb[0].mxu0
    %v721 = vadd.f32 %v615, %v720
    %v722 = vpop.f32.mrb[0].mxu0
    %v723 = vpop.f32.mrb[0].mxu0
    %v724 = vadd.f32 %v615, %v723
    %v725 = vpop.f32.mrb[0].mxu0
    %726 = vmatprep.mubr.bf16.mxu0 0
    %727 = vmatmul.mubr.bf16.gmra.mrb[0].mxu0 %v646
    %v728 = vpop.f32.mrb[0].mxu0
    %v729 = vadd.f32 %v615, %v728
    %v730 = vpop.f32.mrb[0].mxu0
    %v731 = vpop.f32.mrb[0].mxu0
    %v732 = vadd.f32 %v615, %v731
    %v733 = vpop.f32.mrb[0].mxu0
    %734 = vmatprep.mubr.bf16.mxu0 0
    %735 = vmatmul.mubr.bf16.gmra.mrb[0].mxu0 %v649
    %v736 = vpop.f32.mrb[0].mxu0
    %v737 = vadd.f32 %v615, %v736
    %v738 = vpop.f32.mrb[0].mxu0
    %v739 = vpop.f32.mrb[0].mxu0
    %v740 = vadd.f32 %v615, %v739
    %v741 = vpop.f32.mrb[0].mxu0
    %742 = vmatprep.mubr.bf16.mxu0 0
    %743 = vmatmul.mubr.bf16.gmra.mrb[0].mxu0 %v652
    %v744 = vpop.f32.mrb[0].mxu0
    %v745 = vadd.f32 %v615, %v744
    %v746 = vpop.f32.mrb[0].mxu0
    %v747 = vpop.f32.mrb[0].mxu0
    %v748 = vadd.f32 %v615, %v747
    %v749 = vpop.f32.mrb[0].mxu0
    %750 = vdwg.mxu0
    %v751 = vmax.f32 %v689, 0.0
    %v752 = vmax.f32 %v692, 0.0
    %v753 = vmax.f32 %v697, 0.0
    %v754 = vmax.f32 %v700, 0.0
    %v755 = vmax.f32 %v705, 0.0
    %v756 = vmax.f32 %v708, 0.0
    %v757 = vmax.f32 %v713, 0.0
    %v758 = vmax.f32 %v716, 0.0
    %v759 = vmax.f32 %v721, 0.0
    %v760 = vmax.f32 %v724, 0.0
    %v761 = vmax.f32 %v729, 0.0
    %v762 = vmax.f32 %v732, 0.0
    %v763 = vmax.f32 %v737, 0.0
    %v764 = vmax.f32 %v740, 0.0
    %v765 = vmax.f32 %v745, 0.0
    %v766 = vmax.f32 %v748, 0.0
    %v767 = vpack.c.bf16 %v752, %v751
    %v768 = vpack.c.bf16 %v754, %v753
    %v769 = vpack.c.bf16 %v756, %v755
    %v770 = vpack.c.bf16 %v758, %v757
    %v771 = vpack.c.bf16 %v760, %v759
    %v772 = vpack.c.bf16 %v762, %v761
    %v773 = vpack.c.bf16 %v764, %v763
    %v774 = vpack.c.bf16 %v766, %v765
    %775 = vmatprep.subr.bf16.mxu0 0
    %776 = vmatpush1.bf16.msra.mxu0 %v767
    %777 = vmatprep.subr.bf16.mxu0 0
    %778 = vmatpush1.bf16.msra.mxu0 %v768
    %779 = vmatprep.subr.bf16.mxu0 0
    %780 = vmatpush1.bf16.msra.mxu0 %v769
    %781 = vmatprep.subr.bf16.mxu0 0
    %782 = vmatpush1.bf16.msra.mxu0 %v770
    %783 = vmatprep.subr.bf16.mxu0 0
    %784 = vmatpush1.bf16.msra.mxu0 %v771
    %785 = vmatprep.subr.bf16.mxu0 0
    %786 = vmatpush1.bf16.msra.mxu0 %v772
    %787 = vmatprep.subr.bf16.mxu0 0
    %788 = vmatpush1.bf16.msra.mxu0 %v773
    %789 = vmatprep.subr.bf16.mxu0 0
    %790 = vmatpush1.bf16.msra.mxu0 %v774
    %791 = vmatprep.subr.bf16.mxu0 0
    %792 = vmatpush1.bf16.msra.mxu0 0
    %793 = vmatprep.subr.bf16.mxu0 0
    %794 = vmatpush1.bf16.msra.mxu0 0
    %795 = vmatprep.subr.bf16.mxu0 0
    %796 = vmatpush1.bf16.msra.mxu0 0
    %797 = vmatprep.subr.bf16.mxu0 0
    %798 = vmatpush1.bf16.msra.mxu0 0
    %799 = vmatprep.subr.bf16.mxu0 0
    %800 = vmatpush1.bf16.msra.mxu0 0
    %801 = vmatprep.subr.bf16.mxu0 0
    %802 = vmatpush1.bf16.msra.mxu0 0
    %803 = vmatprep.subr.bf16.mxu0 0
    %804 = vmatpush1.bf16.msra.mxu0 0
    %805 = vmatprep.subr.bf16.mxu0 0
    %806 = vmatpush1.bf16.msra.mxu0 0
    %807 = vmatprep.mubr.bf16.mxu0 0
    %808 = vmatmul.mubr.bf16.gmra.mrb[0].mxu0 %v174
    %v809 = vpop.f32.mrb[0].mxu0
    %v810 = vadd.f32 0.0, %v809
    %v811 = vpop.f32.mrb[0].mxu0
    %v812 = vpop.f32.mrb[0].mxu0
    %v813 = vadd.f32 0.0, %v812
    %v814 = vpop.f32.mrb[0].mxu0
    %815 = vmatprep.mubr.bf16.mxu0 0
    %816 = vmatmul.mubr.bf16.gmra.mrb[0].mxu0 %v175
    %v817 = vpop.f32.mrb[0].mxu0
    %v818 = vadd.f32 0.0, %v817
    %v819 = vpop.f32.mrb[0].mxu0
    %v820 = vpop.f32.mrb[0].mxu0
    %v821 = vadd.f32 0.0, %v820
    %v822 = vpop.f32.mrb[0].mxu0
    %823 = vmatprep.mubr.bf16.mxu0 0
    %824 = vmatmul.mubr.bf16.gmra.mrb[0].mxu0 %v176
    %v825 = vpop.f32.mrb[0].mxu0
    %v826 = vadd.f32 0.0, %v825
    %v827 = vpop.f32.mrb[0].mxu0
    %v828 = vpop.f32.mrb[0].mxu0
    %v829 = vadd.f32 0.0, %v828
    %v830 = vpop.f32.mrb[0].mxu0
    %831 = vmatprep.mubr.bf16.mxu0 0
    %832 = vmatmul.mubr.bf16.gmra.mrb[0].mxu0 %v177
    %v833 = vpop.f32.mrb[0].mxu0
    %v834 = vadd.f32 0.0, %v833
    %v835 = vpop.f32.mrb[0].mxu0
    %v836 = vpop.f32.mrb[0].mxu0
    %v837 = vadd.f32 0.0, %v836
    %v838 = vpop.f32.mrb[0].mxu0
    %839 = vmatprep.mubr.bf16.mxu0 0
    %840 = vmatmul.mubr.bf16.gmra.mrb[0].mxu0 %v178
    %v841 = vpop.f32.mrb[0].mxu0
    %v842 = vadd.f32 0.0, %v841
    %v843 = vpop.f32.mrb[0].mxu0
    %v844 = vpop.f32.mrb[0].mxu0
    %v845 = vadd.f32 0.0, %v844
    %v846 = vpop.f32.mrb[0].mxu0
    %847 = vmatprep.mubr.bf16.mxu0 0
    %848 = vmatmul.mubr.bf16.gmra.mrb[0].mxu0 %v179
    %v849 = vpop.f32.mrb[0].mxu0
    %v850 = vadd.f32 0.0, %v849
    %v851 = vpop.f32.mrb[0].mxu0
    %v852 = vpop.f32.mrb[0].mxu0
    %v853 = vadd.f32 0.0, %v852
    %v854 = vpop.f32.mrb[0].mxu0
    %855 = vmatprep.mubr.bf16.mxu0 0
    %856 = vmatmul.mubr.bf16.gmra.mrb[0].mxu0 %v180
    %v857 = vpop.f32.mrb[0].mxu0
    %v858 = vadd.f32 0.0, %v857
    %v859 = vpop.f32.mrb[0].mxu0
    %v860 = vpop.f32.mrb[0].mxu0
    %v861 = vadd.f32 0.0, %v860
    %v862 = vpop.f32.mrb[0].mxu0
    %863 = vmatprep.mubr.bf16.mxu0 0
    %864 = vmatmul.mubr.bf16.gmra.mrb[0].mxu0 %v181
    %v865 = vpop.f32.mrb[0].mxu0
    %v866 = vadd.f32 0.0, %v865
    %v867 = vpop.f32.mrb[0].mxu0
    %v868 = vpop.f32.mrb[0].mxu0
    %v869 = vadd.f32 0.0, %v868
    %v870 = vpop.f32.mrb[0].mxu0
    %871 = vdwg.mxu0
    %v872 = vpack.c.bf16 %v813, %v810
    %v873 = vpack.c.bf16 %v821, %v818
    %v874 = vpack.c.bf16 %v829, %v826
    %v875 = vpack.c.bf16 %v837, %v834
    %v876 = vpack.c.bf16 %v845, %v842
    %v877 = vpack.c.bf16 %v853, %v850
    %v878 = vpack.c.bf16 %v861, %v858
    %v879 = vpack.c.bf16 %v869, %v866
    %v880 = vld [vmem:[#allocation7] sm:$0xf]
    %v881 = vld [vmem:[#allocation7 + $0x4] sm:$0xf]
    %v882 = vld [vmem:[#allocation7 + $0x8] sm:$0xf]
    %v883 = vld [vmem:[#allocation7 + $0xc] sm:$0xf]
    %v884 = vld [vmem:[#allocation8] sm:$0x1]
    %v886 = vlaneseq
    %v887 = vshrl.u32 %v886, 7
    %v888 = vsub.s32 0, %v887
    %v889 = vrot.slane %v884, %v888
    %v895 = vunpack.c.l.b16 %v880
    %v896 = vunpack.c.l.b16 %v881
    %v897 = vunpack.c.l.b16 %v882
    %v898 = vunpack.c.l.b16 %v883
    %v899 = vpack.c.b16 %v896, %v895
    %v900 = vpack.c.b16 %v898, %v897
    %v904 = vsel %vm629, %v872, 0
    %v907 = vsel %vm629, %v873, 0
    %v910 = vsel %vm629, %v874, 0
    %v913 = vsel %vm629, %v875, 0
    %v916 = vsel %vm629, %v876, 0
    %v919 = vsel %vm629, %v877, 0
    %v922 = vsel %vm629, %v878, 0
    %v925 = vsel %vm629, %v879, 0
    %927 = vmatprep.subr.bf16.mxu0 0
    %928 = vmatpush1.bf16.msra.mxu0 %v899
    %929 = vmatprep.subr.bf16.mxu0 0
    %930 = vmatpush1.bf16.msra.mxu0 %v900
    %931 = vmatprep.subr.bf16.mxu0 0
    %932 = vmatpush1.bf16.msra.mxu0 0
    %933 = vmatprep.subr.bf16.mxu0 0
    %934 = vmatpush1.bf16.msra.mxu0 0
    %935 = vmatprep.subr.bf16.mxu0 0
    %936 = vmatpush1.bf16.msra.mxu0 0
    %937 = vmatprep.subr.bf16.mxu0 0
    %938 = vmatpush1.bf16.msra.mxu0 0
    %939 = vmatprep.subr.bf16.mxu0 0
    %940 = vmatpush1.bf16.msra.mxu0 0
    %941 = vmatprep.subr.bf16.mxu0 0
    %942 = vmatpush1.bf16.msra.mxu0 0
    %943 = vmatprep.subr.bf16.mxu0 0
    %944 = vmatpush1.bf16.msra.mxu0 0
    %945 = vmatprep.subr.bf16.mxu0 0
    %946 = vmatpush1.bf16.msra.mxu0 0
    %947 = vmatprep.subr.bf16.mxu0 0
    %948 = vmatpush1.bf16.msra.mxu0 0
    %949 = vmatprep.subr.bf16.mxu0 0
    %950 = vmatpush1.bf16.msra.mxu0 0
    %951 = vmatprep.subr.bf16.mxu0 0
    %952 = vmatpush1.bf16.msra.mxu0 0
    %953 = vmatprep.subr.bf16.mxu0 0
    %954 = vmatpush1.bf16.msra.mxu0 0
    %955 = vmatprep.subr.bf16.mxu0 0
    %956 = vmatpush1.bf16.msra.mxu0 0
    %957 = vmatprep.subr.bf16.mxu0 0
    %958 = vmatpush1.bf16.msra.mxu0 0
    %959 = vmatprep.mubr.bf16.mxu0 0
    %960 = vmatmul.mubr.bf16.gmra.mrb[0].mxu0 %v904
    %v961 = vpop.f32.mrb[0].mxu0
    %v962 = vadd.f32 %v889, %v961
    %v963 = vpop.f32.mrb[0].mxu0
    %v964 = vpop.f32.mrb[0].mxu0
    %v965 = vadd.f32 %v889, %v964
    %v966 = vpop.f32.mrb[0].mxu0
    %967 = vmatprep.mubr.bf16.mxu0 0
    %968 = vmatmul.mubr.bf16.gmra.mrb[0].mxu0 %v907
    %v969 = vpop.f32.mrb[0].mxu0
    %v970 = vadd.f32 %v889, %v969
    %v971 = vpop.f32.mrb[0].mxu0
    %v972 = vpop.f32.mrb[0].mxu0
    %v973 = vadd.f32 %v889, %v972
    %v974 = vpop.f32.mrb[0].mxu0
    %975 = vmatprep.mubr.bf16.mxu0 0
    %976 = vmatmul.mubr.bf16.gmra.mrb[0].mxu0 %v910
    %v977 = vpop.f32.mrb[0].mxu0
    %v978 = vadd.f32 %v889, %v977
    %v979 = vpop.f32.mrb[0].mxu0
    %v980 = vpop.f32.mrb[0].mxu0
    %v981 = vadd.f32 %v889, %v980
    %v982 = vpop.f32.mrb[0].mxu0
    %983 = vmatprep.mubr.bf16.mxu0 0
    %984 = vmatmul.mubr.bf16.gmra.mrb[0].mxu0 %v913
    %v985 = vpop.f32.mrb[0].mxu0
    %v986 = vadd.f32 %v889, %v985
    %v987 = vpop.f32.mrb[0].mxu0
    %v988 = vpop.f32.mrb[0].mxu0
    %v989 = vadd.f32 %v889, %v988
    %v990 = vpop.f32.mrb[0].mxu0
    %991 = vmatprep.mubr.bf16.mxu0 0
    %992 = vmatmul.mubr.bf16.gmra.mrb[0].mxu0 %v916
    %v993 = vpop.f32.mrb[0].mxu0
    %v994 = vadd.f32 %v889, %v993
    %v995 = vpop.f32.mrb[0].mxu0
    %v996 = vpop.f32.mrb[0].mxu0
    %v997 = vadd.f32 %v889, %v996
    %v998 = vpop.f32.mrb[0].mxu0
    %999 = vmatprep.mubr.bf16.mxu0 0
    %1000 = vmatmul.mubr.bf16.gmra.mrb[0].mxu0 %v919
    %v1001 = vpop.f32.mrb[0].mxu0
    %v1002 = vadd.f32 %v889, %v1001
    %v1003 = vpop.f32.mrb[0].mxu0
    %v1004 = vpop.f32.mrb[0].mxu0
    %v1005 = vadd.f32 %v889, %v1004
    %v1006 = vpop.f32.mrb[0].mxu0
    %1007 = vmatprep.mubr.bf16.mxu0 0
    %1008 = vmatmul.mubr.bf16.gmra.mrb[0].mxu0 %v922
    %v1009 = vpop.f32.mrb[0].mxu0
    %v1010 = vadd.f32 %v889, %v1009
    %v1011 = vpop.f32.mrb[0].mxu0
    %v1012 = vpop.f32.mrb[0].mxu0
    %v1013 = vadd.f32 %v889, %v1012
    %v1014 = vpop.f32.mrb[0].mxu0
    %1015 = vmatprep.mubr.bf16.mxu0 0
    %1016 = vmatmul.mubr.bf16.gmra.mrb[0].mxu0 %v925
    %v1017 = vpop.f32.mrb[0].mxu0
    %v1018 = vadd.f32 %v889, %v1017
    %v1019 = vpop.f32.mrb[0].mxu0
    %v1020 = vpop.f32.mrb[0].mxu0
    %v1021 = vadd.f32 %v889, %v1020
    %v1022 = vpop.f32.mrb[0].mxu0
    %1023 = vdwg.mxu0
    %v1024 = vmax.f32 %v962, 0.0
    %v1025 = vmax.f32 %v965, 0.0
    %v1026 = vmax.f32 %v970, 0.0
    %v1027 = vmax.f32 %v973, 0.0
    %v1028 = vmax.f32 %v978, 0.0
    %v1029 = vmax.f32 %v981, 0.0
    %v1030 = vmax.f32 %v986, 0.0
    %v1031 = vmax.f32 %v989, 0.0
    %v1032 = vmax.f32 %v994, 0.0
    %v1033 = vmax.f32 %v997, 0.0
    %v1034 = vmax.f32 %v1002, 0.0
    %v1035 = vmax.f32 %v1005, 0.0
    %v1036 = vmax.f32 %v1010, 0.0
    %v1037 = vmax.f32 %v1013, 0.0
    %v1038 = vmax.f32 %v1018, 0.0
    %v1039 = vmax.f32 %v1021, 0.0
    %v1040 = vld [vmem:[#allocation2] sm:$0xf]
    %v1041 = vld [vmem:[#allocation2 + $0x4] sm:$0xf]
    %v1042 = vpack.c.bf16 %v1025, %v1024
    %v1043 = vpack.c.bf16 %v1027, %v1026
    %v1044 = vpack.c.bf16 %v1029, %v1028
    %v1045 = vpack.c.bf16 %v1031, %v1030
    %v1046 = vpack.c.bf16 %v1033, %v1032
    %v1047 = vpack.c.bf16 %v1035, %v1034
    %v1048 = vpack.c.bf16 %v1037, %v1036
    %v1049 = vpack.c.bf16 %v1039, %v1038
    %v1052 = vunpack.c.l.b16 %v1040
    %v1053 = vunpack.c.l.b16 %v1041
    %v1054 = vpack.c.b16 %v1053, %v1052
    %1056 = vmatprep.subr.bf16.mxu0 0
    %1057 = vmatpush1.bf16.msra.mxu0 %v1042
    %1058 = vmatprep.subr.bf16.mxu0 0
    %1059 = vmatpush1.bf16.msra.mxu0 %v1043
    %1060 = vmatprep.subr.bf16.mxu0 0
    %1061 = vmatpush1.bf16.msra.mxu0 %v1044
    %1062 = vmatprep.subr.bf16.mxu0 0
    %1063 = vmatpush1.bf16.msra.mxu0 %v1045
    %1064 = vmatprep.subr.bf16.mxu0 0
    %1065 = vmatpush1.bf16.msra.mxu0 %v1046
    %1066 = vmatprep.subr.bf16.mxu0 0
    %1067 = vmatpush1.bf16.msra.mxu0 %v1047
    %1068 = vmatprep.subr.bf16.mxu0 0
    %1069 = vmatpush1.bf16.msra.mxu0 %v1048
    %1070 = vmatprep.subr.bf16.mxu0 0
    %1071 = vmatpush1.bf16.msra.mxu0 %v1049
    %1072 = vmatprep.subr.bf16.mxu0 0
    %1073 = vmatpush1.bf16.msra.mxu0 0
    %1074 = vmatprep.subr.bf16.mxu0 0
    %1075 = vmatpush1.bf16.msra.mxu0 0
    %1076 = vmatprep.subr.bf16.mxu0 0
    %1077 = vmatpush1.bf16.msra.mxu0 0
    %1078 = vmatprep.subr.bf16.mxu0 0
    %1079 = vmatpush1.bf16.msra.mxu0 0
    %1080 = vmatprep.subr.bf16.mxu0 0
    %1081 = vmatpush1.bf16.msra.mxu0 0
    %1082 = vmatprep.subr.bf16.mxu0 0
    %1083 = vmatpush1.bf16.msra.mxu0 0
    %1084 = vmatprep.subr.bf16.mxu0 0
    %1085 = vmatpush1.bf16.msra.mxu0 0
    %1086 = vmatprep.subr.bf16.mxu0 0
    %1087 = vmatpush1.bf16.msra.mxu0 0
    %1088 = vmatprep.mubr.bf16.mxu0 0
    %1089 = vmatmul.mubr.bf16.gmra.mrb[0].mxu0 %v1054
    %v1090 = vpop.f32.mrb[0].mxu0
    %v1091 = vadd.f32 0.0, %v1090
    %v1092 = vpop.f32.mrb[0].mxu0
    %v1093 = vpop.f32.mrb[0].mxu0
    %v1094 = vadd.f32 0.0, %v1093
    %v1095 = vpop.f32.mrb[0].mxu0
    %1096 = vdwg.mxu0
    %v1097 = vpack.c.bf16 %v1094, %v1091
    %v1098 = vld [vmem:[%s9] sm:$0xf]
    %v1099 = vld [vmem:[%s9 + $0x4] sm:$0xf]
    %v1100 = vld [vmem:[%s9 + $0x8] sm:$0xf]
    %v1101 = vld [vmem:[%s9 + $0xc] sm:$0xf]
    %v1102 = vld [vmem:[%s10] sm:$0x1]
    %v1104 = vlaneseq
    %v1105 = vshrl.u32 %v1104, 7
    %v1106 = vsub.s32 0, %v1105
    %v1107 = vrot.slane %v1102, %v1106
    %v1113 = vunpack.c.l.b16 %v1098
    %v1114 = vunpack.c.l.b16 %v1099
    %v1115 = vunpack.c.l.b16 %v1100
    %v1116 = vunpack.c.l.b16 %v1101
    %v1117 = vpack.c.b16 %v1114, %v1113
    %v1118 = vpack.c.b16 %v1116, %v1115
    %v1122 = vsel %vm629, %v1097, 0
    %1124 = vmatprep.subr.bf16.mxu0 0
    %1125 = vmatpush1.bf16.msra.mxu0 %v1117
    %1126 = vmatprep.subr.bf16.mxu0 0
    %1127 = vmatpush1.bf16.msra.mxu0 %v1118
    %1128 = vmatprep.subr.bf16.mxu0 0
    %1129 = vmatpush1.bf16.msra.mxu0 0
    %1130 = vmatprep.subr.bf16.mxu0 0
    %1131 = vmatpush1.bf16.msra.mxu0 0
    %1132 = vmatprep.subr.bf16.mxu0 0
    %1133 = vmatpush1.bf16.msra.mxu0 0
    %1134 = vmatprep.subr.bf16.mxu0 0
    %1135 = vmatpush1.bf16.msra.mxu0 0
    %1136 = vmatprep.subr.bf16.mxu0 0
    %1137 = vmatpush1.bf16.msra.mxu0 0
    %1138 = vmatprep.subr.bf16.mxu0 0
    %1139 = vmatpush1.bf16.msra.mxu0 0
    %1140 = vmatprep.subr.bf16.mxu0 0
    %1141 = vmatpush1.bf16.msra.mxu0 0
    %1142 = vmatprep.subr.bf16.mxu0 0
    %1143 = vmatpush1.bf16.msra.mxu0 0
    %1144 = vmatprep.subr.bf16.mxu0 0
    %1145 = vmatpush1.bf16.msra.mxu0 0
    %1146 = vmatprep.subr.bf16.mxu0 0
    %1147 = vmatpush1.bf16.msra.mxu0 0
    %1148 = vmatprep.subr.bf16.mxu0 0
    %1149 = vmatpush1.bf16.msra.mxu0 0
    %1150 = vmatprep.subr.bf16.mxu0 0
    %1151 = vmatpush1.bf16.msra.mxu0 0
    %1152 = vmatprep.subr.bf16.mxu0 0
    %1153 = vmatpush1.bf16.msra.mxu0 0
    %1154 = vmatprep.subr.bf16.mxu0 0
    %1155 = vmatpush1.bf16.msra.mxu0 0
    %1156 = vmatprep.mubr.bf16.mxu0 0
    %1157 = vmatmul.mubr.bf16.gmra.mrb[0].mxu0 %v1122
    %v1158 = vpop.f32.mrb[0].mxu0
    %v1159 = vadd.f32 %v1107, %v1158
    %v1160 = vpop.f32.mrb[0].mxu0
    %v1161 = vpop.f32.mrb[0].mxu0
    %v1162 = vadd.f32 %v1107, %v1161
    %v1163 = vpop.f32.mrb[0].mxu0
    %1164 = vdwg.mxu0
    %v1165 = vmax.f32 %v1159, 0.0
    %v1166 = vmax.f32 %v1162, 0.0
    %v1167 = vpack.c.bf16 %v1166, %v1165
    %v1168 = vld [vmem:[#allocation10] sm:$0xf]
    %v1169 = vld [vmem:[#allocation10 + $0x4] sm:$0xf]
    %v1170 = vld [vmem:[#allocation10 + $0x8] sm:$0xf]
    %v1171 = vld [vmem:[#allocation10 + $0xc] sm:$0xf]
    %v1172 = vld [vmem:[%s12] sm:$0x1]
    %v1174 = vlaneseq
    %v1175 = vshrl.u32 %v1174, 7
    %v1176 = vsub.s32 0, %v1175
    %v1177 = vrot.slane %v1172, %v1176
    %v1183 = vunpack.c.l.b16 %v1168
    %v1184 = vunpack.c.l.b16 %v1169
    %v1185 = vunpack.c.l.b16 %v1170
    %v1186 = vunpack.c.l.b16 %v1171
    %v1187 = vpack.c.b16 %v1184, %v1183
    %v1188 = vpack.c.b16 %v1186, %v1185
    %v1192 = vsel %vm629, %v1167, 0
    %1194 = vmatprep.subr.bf16.mxu0 0
    %1195 = vmatpush1.bf16.msra.mxu0 %v1187
    %1196 = vmatprep.subr.bf16.mxu0 0
    %1197 = vmatpush1.bf16.msra.mxu0 %v1188
    %1198 = vmatprep.subr.bf16.mxu0 0
    %1199 = vmatpush1.bf16.msra.mxu0 0
    %1200 = vmatprep.subr.bf16.mxu0 0
    %1201 = vmatpush1.bf16.msra.mxu0 0
    %1202 = vmatprep.subr.bf16.mxu0 0
    %1203 = vmatpush1.bf16.msra.mxu0 0
    %1204 = vmatprep.subr.bf16.mxu0 0
    %1205 = vmatpush1.bf16.msra.mxu0 0
    %1206 = vmatprep.subr.bf16.mxu0 0
    %1207 = vmatpush1.bf16.msra.mxu0 0
    %1208 = vmatprep.subr.bf16.mxu0 0
    %1209 = vmatpush1.bf16.msra.mxu0 0
    %1210 = vmatprep.subr.bf16.mxu0 0
    %1211 = vmatpush1.bf16.msra.mxu0 0
    %1212 = vmatprep.subr.bf16.mxu0 0
    %1213 = vmatpush1.bf16.msra.mxu0 0
    %1214 = vmatprep.subr.bf16.mxu0 0
    %1215 = vmatpush1.bf16.msra.mxu0 0
    %1216 = vmatprep.subr.bf16.mxu0 0
    %1217 = vmatpush1.bf16.msra.mxu0 0
    %1218 = vmatprep.subr.bf16.mxu0 0
    %1219 = vmatpush1.bf16.msra.mxu0 0
    %1220 = vmatprep.subr.bf16.mxu0 0
    %1221 = vmatpush1.bf16.msra.mxu0 0
    %1222 = vmatprep.subr.bf16.mxu0 0
    %1223 = vmatpush1.bf16.msra.mxu0 0
    %1224 = vmatprep.subr.bf16.mxu0 0
    %1225 = vmatpush1.bf16.msra.mxu0 0
    %1226 = vmatprep.mubr.bf16.mxu0 0
    %1227 = vmatmul.mubr.bf16.gmra.mrb[0].mxu0 %v1192
    %v1228 = vpop.f32.mrb[0].mxu0
    %v1229 = vadd.f32 %v1177, %v1228
    %v1230 = vpop.f32.mrb[0].mxu0
    %v1231 = vpop.f32.mrb[0].mxu0
    %v1232 = vadd.f32 %v1177, %v1231
    %v1233 = vpop.f32.mrb[0].mxu0
    %1234 = vdwg.mxu0
    %1235 = vst [vmem:[#allocation11] sm:$0xff] %v1229
    %1236 = vst [vmem:[#allocation11 + $0x8] sm:$0xff] %v1232
    // Predicated region
    $region74: #{tpu_custom_call.1} parent=1 // pred_check
      _
    $region75: #{tpu_custom_call.1} parent=1 // pred_check_branch
      %1238 = sbr.rel (0) target = $region77
    $region76: #{tpu_custom_call.1} parent=1 // pred_region
      %s1240 = ssub.s32 256, 256
      %1241 = vsyncadd [#allocation4], %s1240
      %s1242 = sshll.u32 [#allocation11], 4
      %s1243 = int_to_ptr.vmem [resolvable:$true] %s1242
      %1248 = dma.vmem_to_hbm [thread:$0]  %s1243, 256, %s13, [#allocation4], 128, 128, 8
    $region77: #{tpu_custom_call.1} parent=1 // pred_fallthru
      _
    // Predicated region
    $region78: #{tpu_custom_call.1} parent=1 // pred_check
      _
    $region79: #{tpu_custom_call.1} parent=1 // pred_check_branch
      %1250 = sbr.rel (0) target = $region81
    $region80: #{tpu_custom_call.1} parent=1 // pred_region
      %1251 = dma.done [#allocation4], 256
    $region81: #{tpu_custom_call.1} parent=1 // pred_fallthru
      _
    %1252 = vsyncpa [#allocation3], 1
    %1253 = vsyncpa [#allocation6], 1
    %1254 = vsyncpa [#allocation9], 1
    %1255 = vsyncpa [#allocation4], 1

</llo_original>
